<compile_context>
chip_gen: v5e
topology: v5e:2x2
jax: 0.10.0
libtpu: 0.0.40
codegen_flags: <defaults>
</compile_context>

<pallas_src>
import jax
import jax.numpy as jnp
from jax.experimental import pallas as pl
from jax.experimental.pallas import tpu as pltpu

NEGATIVE_SLOPE = 0.01  # nn.LeakyReLU() default used in tcnn

# Lane widths to try (largest first) -- all multiples of 128 for unmasked vst.
_LANE_WIDTHS = (1024, 512, 256, 128)
# Target bytes per block (per buffer). 4 MiB -> with in+out double-buffering
# that's 16 MiB of VMEM, comfortably under the 32 MiB limit we request below.
_TARGET_BLOCK_BYTES = 4 * 1024 * 1024
# Explicit scoped-VMEM request: safe on v5e/v6e (128 MiB physical) and
# v7x (64 MiB physical), and well above what the pipeline needs.
_VMEM_LIMIT_BYTES = 32 * 1024 * 1024
# Below this element count, let XLA fuse the jnp.where into neighbors instead
# of paying pallas_call launch + grid-step overhead.
_MIN_PALLAS_ELEMS = 1 << 18


def _leaky_relu_kernel(x_ref, o_ref):
    x = x_ref[...]
    # Python-float slope: weak typing keeps the compute in the input dtype
    # (bf16 stays bf16), matching torch.nn.LeakyReLU semantics.
    o_ref[...] = jnp.where(x >= 0, x, x * NEGATIVE_SLOPE).astype(o_ref.dtype)


def _leaky_relu_pallas(data, *, donate_input=False):
    """LeakyReLU via a tiled, pipelined Pallas kernel. Shape/dtype preserved."""
    orig_shape = data.shape
    total = data.size
    itemsize = jnp.dtype(data.dtype).itemsize

    # Pick a lane-dense layout: last dim a large multiple of 128.
    width = None
    for w in _LANE_WIDTHS:
        if total % w == 0:
            width = w
            break

    flat1d = data.reshape(-1)
    if width is None:
        # Element count not divisible by 128: pad the flat view up to the
        # next multiple of 128 and run the same tiled path (bounded VMEM,
        # full pipelining), then slice the result back.
        width = 128
        padded_total = pl.cdiv(total, width) * width
        flat1d = jnp.pad(flat1d, (0, padded_total - total))
    else:
        padded_total = total

    rows = padded_total // width
    flat = flat1d.reshape(rows, width)

    # Dtype-scaled row tile: keep each block ~_TARGET_BLOCK_BYTES regardless
    # of dtype. Multiple of 32 rows satisfies f32/bf16/int8 sublane packing.
    tile_rows = max(32, (_TARGET_BLOCK_BYTES // (width * itemsize)) // 32 * 32)
    if tile_rows >= rows:
        tile_rows = rows  # single block; block_shape == array shape is always legal
    grid = (pl.cdiv(rows, tile_rows),)

    extra_kwargs = {}
    if donate_input:
        # Reuse the input HBM buffer in place when the caller guarantees the
        # pre-activation tensor is dead (halves HBM footprint for this op).
        extra_kwargs["input_output_aliases"] = {0: 0}

    out = pl.pallas_call(
        _leaky_relu_kernel,
        out_shape=jax.ShapeDtypeStruct((rows, width), flat.dtype),
        grid=grid,
        in_specs=[pl.BlockSpec((tile_rows, width), lambda i: (i, 0))],
        out_specs=pl.BlockSpec((tile_rows, width), lambda i: (i, 0)),
        compiler_params=pltpu.CompilerParams(
            dimension_semantics=("parallel",),
            vmem_limit_bytes=_VMEM_LIMIT_BYTES,
        ),
        cost_estimate=pl.CostEstimate(
            flops=total,
            transcendentals=0,
            bytes_accessed=2 * total * itemsize,
        ),
        **extra_kwargs,
    )(flat)

    if padded_total != total:
        out = out.reshape(-1)[:total]
    return out.reshape(orig_shape)


def tree_activation(x, *, force_pallas=False, donate_input=False):
    """x is a tuple (data, indexes). Returns (leaky_relu(data), indexes)."""
    data, indexes = x
    if not force_pallas and data.size < _MIN_PALLAS_ELEMS:
        # Tiny trees: skip the custom call; XLA fuses this into neighbors.
        return jnp.where(data >= 0, data, data * NEGATIVE_SLOPE), indexes
    return _leaky_relu_pallas(data, donate_input=donate_input), indexes


def _ref_leaky_relu(data):
    return jnp.where(data >= 0, data, data * NEGATIVE_SLOPE)


if __name__ == "__main__":
    key = jax.random.PRNGKey(0)
    k_data, k_idx, k_odd, k_big = jax.random.split(key, 4)

    # --- Case 1: tree-conv-shaped tiny inputs, forced through the kernel ---
    batch, channels, nodes = 2, 4, 16
    data = jax.random.normal(k_data, (batch, channels, nodes), dtype=jnp.float32)
    indexes = jax.random.randint(
        k_idx, (batch, 3 * nodes, 1), minval=0, maxval=nodes, dtype=jnp.int32
    )

    out_data, out_idx = tree_activation((data, indexes), force_pallas=True)
    jax.block_until_ready(out_data)
    jax.block_until_ready(out_idx)

    ref = _ref_leaky_relu(data)
    assert out_data.shape == data.shape and out_data.dtype == data.dtype
    assert jnp.allclose(out_data, ref, atol=1e-6), "activation mismatch"
    assert (out_idx == indexes).all(), "indexes must pass through unchanged"

    # Size-based dispatch path (pure-JAX fallback for tiny tensors).
    out_small, _ = tree_activation((data, indexes))
    assert jnp.allclose(out_small, ref, atol=1e-6), "dispatch-path mismatch"

    # --- Case 2: element count not divisible by 128 -> padded tiled path ---
    odd = jax.random.normal(k_odd, (3, 5, 7), dtype=jnp.float32)  # 105 elems
    out_odd, _ = tree_activation((odd, indexes), force_pallas=True)
    jax.block_until_ready(out_odd)
    assert out_odd.shape == odd.shape
    assert jnp.allclose(out_odd, _ref_leaky_relu(odd), atol=1e-6), "pad-path mismatch"

    # --- Case 3: medium tensor exercising the multi-step pipelined grid ---
    big = jax.random.normal(k_big, (2, 512, 2048), dtype=jnp.float32)  # 8 MiB
    out_big, _ = tree_activation((big, indexes))  # default dispatch -> Pallas
    jax.block_until_ready(out_big)
    assert jnp.allclose(out_big, _ref_leaky_relu(big), atol=1e-6), "tiled-path mismatch"

    # --- Case 4: bf16 dtype-scaled tile path ---
    big_bf16 = big.astype(jnp.bfloat16)
    out_bf16, _ = tree_activation((big_bf16, indexes))
    jax.block_until_ready(out_bf16)
    assert out_bf16.dtype == jnp.bfloat16
    assert jnp.allclose(
        out_bf16.astype(jnp.float32),
        _ref_leaky_relu(big_bf16).astype(jnp.float32),
        atol=1e-2,
    ), "bf16-path mismatch"

    print("KERNEL_OK")
</pallas_src>

<mosaic_0001>
module attributes {stable_mosaic.version = 11 : i64} {
  func.func @_leaky_relu_kernel(%arg0: i32, %arg1: memref<1x128xf32, #tpu.memory_space<vmem>>, %arg2: memref<1x128xf32, #tpu.memory_space<vmem>>) attributes {dimension_semantics = [#tpu.dimension_semantics<parallel>], iteration_bounds = array<i64: 1>, scalar_prefetch = 0 : i64, scratch_operands = 0 : i64, tpu.core_type = #tpu.core_type<tc>, window_params = [{transform_indices = @transform_0, window_bounds = array<i64: 1, 128>}, {transform_indices = @transform_1, window_bounds = array<i64: 1, 128>}]} {
    %c0 = arith.constant 0 : index
    %c0_0 = arith.constant 0 : index
    %0 = vector.load %arg1[%c0, %c0_0] : memref<1x128xf32, #tpu.memory_space<vmem>>, vector<1x128xf32>
    %cst = arith.constant 0.000000e+00 : f32
    %1 = vector.broadcast %cst : f32 to vector<1x128xf32>
    %2 = arith.cmpf oge, %0, %1 : vector<1x128xf32>
    %cst_1 = arith.constant 0.00999999977 : f32
    %3 = vector.broadcast %cst_1 : f32 to vector<1x128xf32>
    %4 = arith.mulf %0, %3 : vector<1x128xf32>
    %5 = arith.select %2, %0, %4 : vector<1x128xi1>, vector<1x128xf32>
    %c0_2 = arith.constant 0 : index
    %c0_3 = arith.constant 0 : index
    %6 = vector.load %arg2[%c0_2, %c0_3] : memref<1x128xf32, #tpu.memory_space<vmem>>, vector<1x128xf32>
    tpu.vector_store %arg2[%c0_2, %c0_3], %5 {strides = array<i32>} : memref<1x128xf32, #tpu.memory_space<vmem>>, vector<1x128xf32>,
    return
  }
  func.func @transform_0(%arg0: i32) -> (i32, i32) {
    %c0_i32 = arith.constant 0 : i32
    %c0_i32_0 = arith.constant 0 : i32
    return %arg0, %c0_i32 : i32, i32
  }
  func.func @transform_1(%arg0: i32) -> (i32, i32) {
    %c0_i32 = arith.constant 0 : i32
    %c0_i32_0 = arith.constant 0 : i32
    return %arg0, %c0_i32 : i32, i32
  }
}

</mosaic_0001>

<llo_original>
// kernel: tpu_custom_call.1
$region0: #{tpu_custom_call.1}
  #allocation0 [shape = 'u32[]', space=smem, size = 0x4, offset = 0x4, fixed_abs, tag = 'smem constant byte address 0x4 - core index']
  #allocation1 [shape = 'u32[72,128]{1,0:T(1,128)}', space=vmem, size = 0x9000, scoped, tag = 'internal scratch']
  %s0 = inlined_call_operand.hbm [shape: f32[1,128], index: 0, kind: input, shape index: {}]
  %s1 = inlined_call_operand.hbm [shape: f32[1,128], index: 1, kind: output, shape index: {}]
  %s2 = sld [smem:[#allocation0]]
  $region18: #{tpu_custom_call.1} parent=0
    _
  %s4 = ssub.s32 1, %s2
  %s5 = scalar_select 0, %s4, %s2
  $region1: #{tpu_custom_call.1} parent=0
    #allocation2 [shape = 'u8[512]{0}', space=vmem, size = 0x400, scoped, tag = 'input window, operand 0, single buffered']
    #allocation3 [shape = 's32[1]{0}', space=sflag, size = 0x4, scoped, tag = 'scoped memory for tpu_custom_call.1']
    #allocation4 [shape = 's32[1]{0}', space=sflag, size = 0x4, scoped, tag = 'scoped memory for tpu_custom_call.1']
    #allocation5 [shape = 'u8[512]{0}', space=vmem, size = 0x400, scoped, tag = 'output window, operand 0, single buffered']
    %6 = vsyncpa [#allocation3], 0
    %7 = vsyncpa [#allocation4], 0
    // Predicated region
    $region2: #{tpu_custom_call.1} parent=1 // pred_check
      _
    $region3: #{tpu_custom_call.1} parent=1 // pred_check_branch
      %9 = sbr.rel (0) target = $region5
    $region4: #{tpu_custom_call.1} parent=1 // pred_region
      %11 = vsyncadd [#allocation3], 0
      %s13 = sshll.u32 %s0, 4
      %s14 = int_to_ptr.hbm [resolvable:$true] %s13
      %s15 = sshll.u32 [#allocation2], 4
      %s16 = int_to_ptr.vmem [resolvable:$true] %s15
      %18 = dma.hbm_to_vmem [thread:$0]  %s14, 16, %s16, [#allocation3]
    $region5: #{tpu_custom_call.1} parent=1 // pred_fallthru
      _
    // Predicated region
    $region6: #{tpu_custom_call.1} parent=1 // pred_check
      _
    $region7: #{tpu_custom_call.1} parent=1 // pred_check_branch
      %20 = sbr.rel (0) target = $region9
    $region8: #{tpu_custom_call.1} parent=1 // pred_region
      %22 = dma.done [#allocation3], 16
    $region9: #{tpu_custom_call.1} parent=1 // pred_fallthru
      _
    %v23 = vld [vmem:[#allocation2] sm:$0x1]
    %vm24 = vcmp.ge.f32.partialorder %v23, 0.0
    %v25 = vmul.f32 %v23, 0.01
    %v26 = vsel %vm24, %v23, %v25
    %27 = vst [vmem:[#allocation5] sm:$0x1] %v26
    // Predicated region
    $region10: #{tpu_custom_call.1} parent=1 // pred_check
      _
    $region11: #{tpu_custom_call.1} parent=1 // pred_check_branch
      %29 = sbr.rel (0) target = $region13
    $region12: #{tpu_custom_call.1} parent=1 // pred_region
      %31 = vsyncadd [#allocation4], 0
      %s33 = sshll.u32 [#allocation5], 4
      %s34 = int_to_ptr.vmem [resolvable:$true] %s33
      %s35 = sshll.u32 %s1, 4
      %s36 = int_to_ptr.hbm [resolvable:$true] %s35
      %38 = dma.vmem_to_hbm [thread:$0]  %s34, 16, %s36, [#allocation4]
    $region13: #{tpu_custom_call.1} parent=1 // pred_fallthru
      _
    // Predicated region
    $region14: #{tpu_custom_call.1} parent=1 // pred_check
      _
    $region15: #{tpu_custom_call.1} parent=1 // pred_check_branch
      %40 = sbr.rel (0) target = $region17
    $region16: #{tpu_custom_call.1} parent=1 // pred_region
      %42 = dma.done [#allocation4], 16
    $region17: #{tpu_custom_call.1} parent=1 // pred_fallthru
      _
    %43 = vsyncpa [#allocation3], 1
    %44 = vsyncpa [#allocation4], 1

</llo_original>
